<compile_context>
chip_gen: v6e
topology: v6e:2x2x1
jax: 0.10.0
libtpu: 0.0.40
codegen_flags: <defaults>
</compile_context>

<pallas_src>
import math

import jax
import jax.numpy as jnp
from jax.experimental import pallas as pl
from jax.experimental.pallas import tpu as pltpu

HIDDEN = 128
LANE = 128
SUBLANE = 8
MAX_TM = 1024  # rows per batch tile; >=512 amortizes the ~0.35us/step overhead


def _round_up(x, m):
    return ((x + m - 1) // m) * m


def _cdiv(a, b):
    return -(-a // b)


# ----------------------------------------------------------------------------
# Kernel: 4-layer MLP on one batch tile.  All weights/biases fully resident.
# ----------------------------------------------------------------------------
def qnet_kernel(x_ref,
                w1, b1, w2, b2, w3, b3, w4, b4,
                out_ref):
    # x_ref: (TM, K1_pad) bf16;  w*: (in_pad, out_pad) bf16;  b*: (1, out_pad) f32
    h = x_ref[...]                                     # bf16, K=8
    h = jnp.maximum(
        jnp.dot(h, w1[...], preferred_element_type=jnp.float32) + b1[...], 0.0)
    h = jnp.maximum(
        jnp.dot(h.astype(jnp.bfloat16), w2[...],
                preferred_element_type=jnp.float32) + b2[...], 0.0)
    h = jnp.maximum(
        jnp.dot(h.astype(jnp.bfloat16), w3[...],
                preferred_element_type=jnp.float32) + b3[...], 0.0)
    out_ref[...] = (
        jnp.dot(h.astype(jnp.bfloat16), w4[...],
                preferred_element_type=jnp.float32) + b4[...])


# ----------------------------------------------------------------------------
# Parameter init (deterministic re-implementation of NoisyLinear reset_*).
# ----------------------------------------------------------------------------
def init_noisy_linear_params(key, input_dim, output_dim):
    k_wmu, k_bmu, k_weps, k_beps = jax.random.split(key, 4)
    mu_range = 1.0 / math.sqrt(input_dim)
    weight_mu = jax.random.uniform(k_wmu, (output_dim, input_dim),
                                   minval=-mu_range, maxval=mu_range,
                                   dtype=jnp.float32)
    bias_mu = jax.random.uniform(k_bmu, (output_dim,),
                                 minval=-mu_range, maxval=mu_range,
                                 dtype=jnp.float32)
    sigma_init = 0.017
    weight_sigma = jnp.full((output_dim, input_dim), sigma_init, jnp.float32)
    bias_sigma = jnp.full((output_dim,), sigma_init, jnp.float32)
    weight_epsilon = jax.random.normal(k_weps, (output_dim, input_dim), jnp.float32)
    bias_epsilon = jax.random.normal(k_beps, (output_dim,), jnp.float32)
    return (weight_mu, weight_sigma, weight_epsilon,
            bias_mu, bias_sigma, bias_epsilon)


def init_qnet_params(key, input_dim, output_dim):
    k1, k2, k3, k4 = jax.random.split(key, 4)
    return [
        init_noisy_linear_params(k1, input_dim, HIDDEN),
        init_noisy_linear_params(k2, HIDDEN, HIDDEN),
        init_noisy_linear_params(k3, HIDDEN, HIDDEN),
        init_noisy_linear_params(k4, HIDDEN, output_dim),
    ]


# ----------------------------------------------------------------------------
# One-off fusion: run this once per NoisyLinear.reset_epsilon(), NOT per call.
# Produces kernel-ready (W_eff^T, padded, bf16) and (b_eff, padded, f32).
# Only layer-1's input dim is padded to a sublane multiple (8); hidden dims
# are already 128 and the output dim is padded to a full 128-lane width.
# ----------------------------------------------------------------------------
def fuse_qnet_params(params):
    fused = []
    for (wm, ws, we, bm, bs, be) in params:
        w = wm + ws * we                      # (out, in) f32 noise fusion (once)
        b = bm + bs * be                      # (out,)    f32
        out_dim, in_dim = w.shape
        in_pad = _round_up(in_dim, SUBLANE)   # 4 -> 8 for layer 1; 128 stays 128
        out_pad = _round_up(out_dim, LANE)    # 2 -> 128 for layer 4
        wt = jnp.pad(w.T, ((0, in_pad - in_dim), (0, out_pad - out_dim))
                     ).astype(jnp.bfloat16)   # (in_pad, out_pad) bf16
        bp = jnp.pad(b, (0, out_pad - out_dim)).reshape(1, out_pad)  # f32
        fused.append((wt, bp))
    return fused


# ----------------------------------------------------------------------------
# Forward wrapper: pads x (batch to tile multiple, K to 8), tiles the batch,
# calls the Pallas kernel, slices the valid (B, out_dim) result.
# ----------------------------------------------------------------------------
def q_net_forward(x, fused_params, out_dim):
    B, in_dim = x.shape
    k_pad = fused_params[0][0].shape[0]      # padded input width (8 for CartPole)
    n_pad = fused_params[-1][0].shape[1]     # padded output width (>=128)

    # Batch tile: whole batch in one step when it fits; otherwise an EVEN
    # number of <=MAX_TM tiles so the ("parallel",) grid axis shards across
    # both TensorCores on v7x (weights are tiny and duplicate for free).
    if B <= MAX_TM:
        tm = _round_up(max(B, 1), SUBLANE)
    else:
        n_tiles = 2 * _cdiv(B, 2 * MAX_TM)               # even, >= 2
        tm = _round_up(_cdiv(B, n_tiles), SUBLANE)
    b_pad = _round_up(B, tm)

    # Single fused pad + bf16 cast (no zeros().at[].set() HBM round-trip).
    xp = jnp.pad(x, ((0, b_pad - B), (0, k_pad - in_dim))).astype(jnp.bfloat16)

    flat_args = [xp]
    in_specs = [pl.BlockSpec((tm, k_pad), lambda i: (i, 0))]
    for (w, b) in fused_params:
        flat_args += [w, b]
        # Block index (0,0) every step -> Pallas keeps weights resident in
        # VMEM across grid iterations (no per-step re-DMA).
        in_specs += [pl.BlockSpec(w.shape, lambda i: (0, 0)),
                     pl.BlockSpec(b.shape, lambda i: (0, 0))]

    out = pl.pallas_call(
        qnet_kernel,
        out_shape=jax.ShapeDtypeStruct((b_pad, n_pad), jnp.float32),
        grid=(b_pad // tm,),
        in_specs=in_specs,
        out_specs=pl.BlockSpec((tm, n_pad), lambda i: (i, 0)),
        compiler_params=pltpu.CompilerParams(
            dimension_semantics=("parallel",)),
    )(*flat_args)

    # TODO(synk): for tiny acting/eval batches called in a tight loop, stack
    # multiple calls (e.g. online + target net inputs) along M into one
    # pallas_call to amortize launch/wrapper overhead.
    return out[:B, :out_dim]


# ----------------------------------------------------------------------------
# Pure-JAX f32 reference (matches PyTorch Q_net 'Train' mode).
# ----------------------------------------------------------------------------
def q_net_reference(x, params):
    h = x
    for i, (wm, ws, we, bm, bs, be) in enumerate(params):
        w = wm + ws * we
        b = bm + bs * be
        h = h @ w.T + b
        if i < len(params) - 1:
            h = jnp.maximum(h, 0.0)
    return h


if __name__ == "__main__":
    # Small shapes consistent with a DQN state-vector input (CartPole-like).
    batch, input_dim, output_dim = 8, 4, 2

    key = jax.random.PRNGKey(0)
    k_x, k_p = jax.random.split(key)
    x = jax.random.normal(k_x, (batch, input_dim), dtype=jnp.float32)
    params = init_qnet_params(k_p, input_dim, output_dim)

    # Fuse noisy weights ONCE (amortized over many forward calls per reset).
    fused = fuse_qnet_params(params)

    out = q_net_forward(x, fused, output_dim)
    jax.block_until_ready(out)

    ref = q_net_reference(x, params)
    assert out.shape == (batch, output_dim)
    # bf16 matmuls / bf16 x with f32 accumulation: allow small quantization error.
    assert jnp.allclose(out, ref, atol=5e-2, rtol=5e-2), \
        float(jnp.max(jnp.abs(out - ref)))

    print("KERNEL_OK")
</pallas_src>

<mosaic_0001>
module attributes {stable_mosaic.version = 11 : i64} {
  func.func @qnet_kernel(%arg0: i32, %arg1: memref<8x8xbf16, #tpu.memory_space<vmem>>, %arg2: memref<8x128xbf16, #tpu.memory_space<vmem>>, %arg3: memref<1x128xf32, #tpu.memory_space<vmem>>, %arg4: memref<128x128xbf16, #tpu.memory_space<vmem>>, %arg5: memref<1x128xf32, #tpu.memory_space<vmem>>, %arg6: memref<128x128xbf16, #tpu.memory_space<vmem>>, %arg7: memref<1x128xf32, #tpu.memory_space<vmem>>, %arg8: memref<128x128xbf16, #tpu.memory_space<vmem>>, %arg9: memref<1x128xf32, #tpu.memory_space<vmem>>, %arg10: memref<8x128xf32, #tpu.memory_space<vmem>>) attributes {dimension_semantics = [#tpu.dimension_semantics<parallel>], iteration_bounds = array<i64: 1>, scalar_prefetch = 0 : i64, scratch_operands = 0 : i64, tpu.core_type = #tpu.core_type<tc>, window_params = [{transform_indices = @transform_0, window_bounds = array<i64: 8, 8>}, {pipeline_mode = #tpu.pipeline_mode<synchronous>, transform_indices = @transform_1, window_bounds = array<i64: 8, 128>}, {pipeline_mode = #tpu.pipeline_mode<synchronous>, transform_indices = @transform_2, window_bounds = array<i64: 1, 128>}, {pipeline_mode = #tpu.pipeline_mode<synchronous>, transform_indices = @transform_3, window_bounds = array<i64: 128, 128>}, {pipeline_mode = #tpu.pipeline_mode<synchronous>, transform_indices = @transform_4, window_bounds = array<i64: 1, 128>}, {pipeline_mode = #tpu.pipeline_mode<synchronous>, transform_indices = @transform_5, window_bounds = array<i64: 128, 128>}, {pipeline_mode = #tpu.pipeline_mode<synchronous>, transform_indices = @transform_6, window_bounds = array<i64: 1, 128>}, {pipeline_mode = #tpu.pipeline_mode<synchronous>, transform_indices = @transform_7, window_bounds = array<i64: 128, 128>}, {pipeline_mode = #tpu.pipeline_mode<synchronous>, transform_indices = @transform_8, window_bounds = array<i64: 1, 128>}, {transform_indices = @transform_9, window_bounds = array<i64: 8, 128>}]} {
    %c0 = arith.constant 0 : index
    %c0_0 = arith.constant 0 : index
    %0 = vector.load %arg1[%c0, %c0_0] : memref<8x8xbf16, #tpu.memory_space<vmem>>, vector<8x8xbf16>
    %c0_1 = arith.constant 0 : index
    %c0_2 = arith.constant 0 : index
    %1 = vector.load %arg2[%c0_1, %c0_2] : memref<8x128xbf16, #tpu.memory_space<vmem>>, vector<8x128xbf16>
    %cst = arith.constant dense<0.000000e+00> : vector<8x128xf32>
    %2 = tpu.matmul %0, %1, %cst {dimension_numbers = #tpu.dot_dimension_numbers<[1], [0], [0], [1], [0, 0, 1, 1], [], []>} : vector<8x8xbf16>, vector<8x128xbf16>, vector<8x128xf32> -> vector<8x128xf32>
    %c0_3 = arith.constant 0 : index
    %c0_4 = arith.constant 0 : index
    %3 = vector.load %arg3[%c0_3, %c0_4] : memref<1x128xf32, #tpu.memory_space<vmem>>, vector<1x128xf32>
    %4 = vector.broadcast %3 : vector<1x128xf32> to vector<8x128xf32>
    %5 = arith.addf %2, %4 : vector<8x128xf32>
    %cst_5 = arith.constant 0.000000e+00 : f32
    %6 = vector.broadcast %cst_5 : f32 to vector<8x128xf32>
    %7 = arith.maximumf %5, %6 : vector<8x128xf32>
    %8 = arith.truncf %7 : vector<8x128xf32> to vector<8x128xbf16>
    %c0_6 = arith.constant 0 : index
    %c0_7 = arith.constant 0 : index
    %9 = vector.load %arg4[%c0_6, %c0_7] : memref<128x128xbf16, #tpu.memory_space<vmem>>, vector<128x128xbf16>
    %cst_8 = arith.constant dense<0.000000e+00> : vector<8x128xf32>
    %10 = tpu.matmul %8, %9, %cst_8 {dimension_numbers = #tpu.dot_dimension_numbers<[1], [0], [0], [1], [0, 0, 1, 1], [], []>} : vector<8x128xbf16>, vector<128x128xbf16>, vector<8x128xf32> -> vector<8x128xf32>
    %c0_9 = arith.constant 0 : index
    %c0_10 = arith.constant 0 : index
    %11 = vector.load %arg5[%c0_9, %c0_10] : memref<1x128xf32, #tpu.memory_space<vmem>>, vector<1x128xf32>
    %12 = vector.broadcast %11 : vector<1x128xf32> to vector<8x128xf32>
    %13 = arith.addf %10, %12 : vector<8x128xf32>
    %cst_11 = arith.constant 0.000000e+00 : f32
    %14 = vector.broadcast %cst_11 : f32 to vector<8x128xf32>
    %15 = arith.maximumf %13, %14 : vector<8x128xf32>
    %16 = arith.truncf %15 : vector<8x128xf32> to vector<8x128xbf16>
    %c0_12 = arith.constant 0 : index
    %c0_13 = arith.constant 0 : index
    %17 = vector.load %arg6[%c0_12, %c0_13] : memref<128x128xbf16, #tpu.memory_space<vmem>>, vector<128x128xbf16>
    %cst_14 = arith.constant dense<0.000000e+00> : vector<8x128xf32>
    %18 = tpu.matmul %16, %17, %cst_14 {dimension_numbers = #tpu.dot_dimension_numbers<[1], [0], [0], [1], [0, 0, 1, 1], [], []>} : vector<8x128xbf16>, vector<128x128xbf16>, vector<8x128xf32> -> vector<8x128xf32>
    %c0_15 = arith.constant 0 : index
    %c0_16 = arith.constant 0 : index
    %19 = vector.load %arg7[%c0_15, %c0_16] : memref<1x128xf32, #tpu.memory_space<vmem>>, vector<1x128xf32>
    %20 = vector.broadcast %19 : vector<1x128xf32> to vector<8x128xf32>
    %21 = arith.addf %18, %20 : vector<8x128xf32>
    %cst_17 = arith.constant 0.000000e+00 : f32
    %22 = vector.broadcast %cst_17 : f32 to vector<8x128xf32>
    %23 = arith.maximumf %21, %22 : vector<8x128xf32>
    %24 = arith.truncf %23 : vector<8x128xf32> to vector<8x128xbf16>
    %c0_18 = arith.constant 0 : index
    %c0_19 = arith.constant 0 : index
    %25 = vector.load %arg8[%c0_18, %c0_19] : memref<128x128xbf16, #tpu.memory_space<vmem>>, vector<128x128xbf16>
    %cst_20 = arith.constant dense<0.000000e+00> : vector<8x128xf32>
    %26 = tpu.matmul %24, %25, %cst_20 {dimension_numbers = #tpu.dot_dimension_numbers<[1], [0], [0], [1], [0, 0, 1, 1], [], []>} : vector<8x128xbf16>, vector<128x128xbf16>, vector<8x128xf32> -> vector<8x128xf32>
    %c0_21 = arith.constant 0 : index
    %c0_22 = arith.constant 0 : index
    %27 = vector.load %arg9[%c0_21, %c0_22] : memref<1x128xf32, #tpu.memory_space<vmem>>, vector<1x128xf32>
    %28 = vector.broadcast %27 : vector<1x128xf32> to vector<8x128xf32>
    %29 = arith.addf %26, %28 : vector<8x128xf32>
    %c0_23 = arith.constant 0 : index
    %c0_24 = arith.constant 0 : index
    %30 = vector.load %arg10[%c0_23, %c0_24] : memref<8x128xf32, #tpu.memory_space<vmem>>, vector<8x128xf32>
    tpu.vector_store %arg10[%c0_23, %c0_24], %29 {strides = array<i32>} : memref<8x128xf32, #tpu.memory_space<vmem>>, vector<8x128xf32>,
    return
  }
  func.func @transform_0(%arg0: i32) -> (i32, i32) {
    %c0_i32 = arith.constant 0 : i32
    %c0_i32_0 = arith.constant 0 : i32
    return %arg0, %c0_i32 : i32, i32
  }
  func.func @transform_1(%arg0: i32) -> (i32, i32) {
    %c0_i32 = arith.constant 0 : i32
    %c0_i32_0 = arith.constant 0 : i32
    %c0_i32_1 = arith.constant 0 : i32
    return %c0_i32, %c0_i32_0 : i32, i32
  }
  func.func @transform_2(%arg0: i32) -> (i32, i32) {
    %c0_i32 = arith.constant 0 : i32
    %c0_i32_0 = arith.constant 0 : i32
    %c0_i32_1 = arith.constant 0 : i32
    return %c0_i32, %c0_i32_0 : i32, i32
  }
  func.func @transform_3(%arg0: i32) -> (i32, i32) {
    %c0_i32 = arith.constant 0 : i32
    %c0_i32_0 = arith.constant 0 : i32
    %c0_i32_1 = arith.constant 0 : i32
    return %c0_i32, %c0_i32_0 : i32, i32
  }
  func.func @transform_4(%arg0: i32) -> (i32, i32) {
    %c0_i32 = arith.constant 0 : i32
    %c0_i32_0 = arith.constant 0 : i32
    %c0_i32_1 = arith.constant 0 : i32
    return %c0_i32, %c0_i32_0 : i32, i32
  }
  func.func @transform_5(%arg0: i32) -> (i32, i32) {
    %c0_i32 = arith.constant 0 : i32
    %c0_i32_0 = arith.constant 0 : i32
    %c0_i32_1 = arith.constant 0 : i32
    return %c0_i32, %c0_i32_0 : i32, i32
  }
  func.func @transform_6(%arg0: i32) -> (i32, i32) {
    %c0_i32 = arith.constant 0 : i32
    %c0_i32_0 = arith.constant 0 : i32
    %c0_i32_1 = arith.constant 0 : i32
    return %c0_i32, %c0_i32_0 : i32, i32
  }
  func.func @transform_7(%arg0: i32) -> (i32, i32) {
    %c0_i32 = arith.constant 0 : i32
    %c0_i32_0 = arith.constant 0 : i32
    %c0_i32_1 = arith.constant 0 : i32
    return %c0_i32, %c0_i32_0 : i32, i32
  }
  func.func @transform_8(%arg0: i32) -> (i32, i32) {
    %c0_i32 = arith.constant 0 : i32
    %c0_i32_0 = arith.constant 0 : i32
    %c0_i32_1 = arith.constant 0 : i32
    return %c0_i32, %c0_i32_0 : i32, i32
  }
  func.func @transform_9(%arg0: i32) -> (i32, i32) {
    %c0_i32 = arith.constant 0 : i32
    %c0_i32_0 = arith.constant 0 : i32
    return %arg0, %c0_i32 : i32, i32
  }
}

</mosaic_0001>

<llo_original>
// kernel: tpu_custom_call.1
$region0: #{tpu_custom_call.1}
  #allocation0 [shape = 'u32[]', space=smem, size = 0x4, offset = 0x4, fixed_abs, tag = 'smem constant byte address 0x4 - core index']
  #allocation1 [shape = 'u32[144,128]{1,0:T(1,128)}', space=vmem, size = 0x12000, scoped, tag = 'internal scratch']
  %s0 = inlined_call_operand.hbm [shape: bf16[8,8], index: 0, kind: input, shape index: {}]
  %s1 = inlined_call_operand.hbm [shape: bf16[8,128], index: 1, kind: input, shape index: {}]
  %s2 = inlined_call_operand.vmem [shape: f32[1,128], index: 2, kind: input, shape index: {}]
  %s3 = inlined_call_operand.hbm [shape: bf16[128,128], index: 3, kind: input, shape index: {}]
  %s4 = inlined_call_operand.vmem [shape: f32[1,128], index: 4, kind: input, shape index: {}]
  %s5 = inlined_call_operand.hbm [shape: bf16[128,128], index: 5, kind: input, shape index: {}]
  %s6 = inlined_call_operand.vmem [shape: f32[1,128], index: 6, kind: input, shape index: {}]
  %s7 = inlined_call_operand.hbm [shape: bf16[128,128], index: 7, kind: input, shape index: {}]
  %s8 = inlined_call_operand.vmem [shape: f32[1,128], index: 8, kind: input, shape index: {}]
  %s9 = inlined_call_operand.hbm [shape: f32[8,128], index: 9, kind: output, shape index: {}]
  %s10 = sld [smem:[#allocation0]]
  $region66: #{tpu_custom_call.1} parent=0
    _
  %s12 = ssub.s32 1, %s10
  %s13 = scalar_select 0, %s12, %s10
  $region1: #{tpu_custom_call.1} parent=0
    #allocation2 [shape = 'u8[2048]{0}', space=vmem, size = 0x800, scoped, tag = 'input window, operand 0, single buffered']
    #allocation3 [shape = 's32[1]{0}', space=sflag, size = 0x4, scoped, tag = 'scoped memory for tpu_custom_call.1']
    #allocation4 [shape = 's32[1]{0}', space=sflag, size = 0x4, scoped, tag = 'scoped memory for tpu_custom_call.1']
    #allocation5 [shape = 'u8[2048]{0}', space=vmem, size = 0x800, scoped, tag = 'input window, operand 1, single buffered']
    #allocation6 [shape = 's32[1]{0}', space=sflag, size = 0x4, scoped, tag = 'scoped memory for tpu_custom_call.1']
    #allocation7 [shape = 'u8[32768]{0}', space=vmem, size = 0x8000, scoped, tag = 'input window, operand 3, single buffered']
    #allocation8 [shape = 'u8[32768]{0}', space=vmem, size = 0x8000, scoped, tag = 'input window, operand 5, single buffered']
    #allocation9 [shape = 's32[1]{0}', space=sflag, size = 0x4, scoped, tag = 'scoped memory for tpu_custom_call.1']
    #allocation10 [shape = 'u8[32768]{0}', space=vmem, size = 0x8000, scoped, tag = 'input window, operand 7, single buffered']
    #allocation11 [shape = 'u8[4096]{0}', space=vmem, size = 0x1000, scoped, tag = 'output window, operand 0, single buffered']
    %14 = vsyncpa [#allocation3], 0
    %15 = vsyncpa [#allocation6], 0
    %16 = vsyncpa [#allocation9], 0
    %17 = vsyncpa [#allocation4], 0
    // Predicated region
    $region2: #{tpu_custom_call.1} parent=1 // pred_check
      _
    $region3: #{tpu_custom_call.1} parent=1 // pred_check_branch
      %19 = sbr.rel (0) target = $region5
    $region4: #{tpu_custom_call.1} parent=1 // pred_region
      %s21 = ssub.s32 64, 64
      %22 = vsyncadd [#allocation3], %s21
      %s24 = sshll.u32 [#allocation2], 4
      %s25 = int_to_ptr.vmem [resolvable:$true] %s24
      %27 = dma.hbm_to_vmem [thread:$0]  %s0, 64, %s25, [#allocation3]
    $region5: #{tpu_custom_call.1} parent=1 // pred_fallthru
      _
    // Predicated region
    $region6: #{tpu_custom_call.1} parent=1 // pred_check
      _
    $region7: #{tpu_custom_call.1} parent=1 // pred_check_branch
      %29 = sbr.rel (0) target = $region9
    $region8: #{tpu_custom_call.1} parent=1 // pred_region
      %s31 = ssub.s32 64, 64
      %32 = vsyncadd [#allocation6], %s31
      %s34 = sshll.u32 [#allocation5], 4
      %s35 = int_to_ptr.vmem [resolvable:$true] %s34
      %37 = dma.hbm_to_vmem [thread:$0]  %s1, 64, %s35, [#allocation6]
    $region9: #{tpu_custom_call.1} parent=1 // pred_fallthru
      _
    // Predicated region
    $region10: #{tpu_custom_call.1} parent=1 // pred_check
      _
    $region11: #{tpu_custom_call.1} parent=1 // pred_check_branch
      %39 = sbr.rel (0) target = $region13
    $region12: #{tpu_custom_call.1} parent=1 // pred_region
      _
    $region13: #{tpu_custom_call.1} parent=1 // pred_fallthru
      _
    // Predicated region
    $region14: #{tpu_custom_call.1} parent=1 // pred_check
      _
    $region15: #{tpu_custom_call.1} parent=1 // pred_check_branch
      %41 = sbr.rel (0) target = $region17
    $region16: #{tpu_custom_call.1} parent=1 // pred_region
      %s43 = ssub.s32 1024, 1024
      %44 = vsyncadd [#allocation6], %s43
      %s45 = sshll.u32 [#allocation7], 4
      %s46 = int_to_ptr.vmem [resolvable:$true] %s45
      %51 = dma.hbm_to_vmem [thread:$0]  %s3, 1024, %s46, [#allocation6], 64, 64, 4
    $region17: #{tpu_custom_call.1} parent=1 // pred_fallthru
      _
    // Predicated region
    $region18: #{tpu_custom_call.1} parent=1 // pred_check
      _
    $region19: #{tpu_custom_call.1} parent=1 // pred_check_branch
      %53 = sbr.rel (0) target = $region21
    $region20: #{tpu_custom_call.1} parent=1 // pred_region
      _
    $region21: #{tpu_custom_call.1} parent=1 // pred_fallthru
      _
    // Predicated region
    $region22: #{tpu_custom_call.1} parent=1 // pred_check
      _
    $region23: #{tpu_custom_call.1} parent=1 // pred_check_branch
      %55 = sbr.rel (0) target = $region25
    $region24: #{tpu_custom_call.1} parent=1 // pred_region
      %s57 = ssub.s32 1024, 1024
      %58 = vsyncadd [#allocation9], %s57
      %s59 = sshll.u32 [#allocation8], 4
      %s60 = int_to_ptr.vmem [resolvable:$true] %s59
      %65 = dma.hbm_to_vmem [thread:$0]  %s5, 1024, %s60, [#allocation9], 64, 64, 4
    $region25: #{tpu_custom_call.1} parent=1 // pred_fallthru
      _
    // Predicated region
    $region26: #{tpu_custom_call.1} parent=1 // pred_check
      _
    $region27: #{tpu_custom_call.1} parent=1 // pred_check_branch
      %67 = sbr.rel (0) target = $region29
    $region28: #{tpu_custom_call.1} parent=1 // pred_region
      _
    $region29: #{tpu_custom_call.1} parent=1 // pred_fallthru
      _
    // Predicated region
    $region30: #{tpu_custom_call.1} parent=1 // pred_check
      _
    $region31: #{tpu_custom_call.1} parent=1 // pred_check_branch
      %69 = sbr.rel (0) target = $region33
    $region32: #{tpu_custom_call.1} parent=1 // pred_region
      %s71 = ssub.s32 1024, 1024
      %72 = vsyncadd [#allocation9], %s71
      %s73 = sshll.u32 [#allocation10], 4
      %s74 = int_to_ptr.vmem [resolvable:$true] %s73
      %79 = dma.hbm_to_vmem [thread:$0]  %s7, 1024, %s74, [#allocation9], 64, 64, 4
    $region33: #{tpu_custom_call.1} parent=1 // pred_fallthru
      _
    // Predicated region
    $region34: #{tpu_custom_call.1} parent=1 // pred_check
      _
    $region35: #{tpu_custom_call.1} parent=1 // pred_check_branch
      %81 = sbr.rel (0) target = $region37
    $region36: #{tpu_custom_call.1} parent=1 // pred_region
      _
    $region37: #{tpu_custom_call.1} parent=1 // pred_fallthru
      _
    // Predicated region
    $region38: #{tpu_custom_call.1} parent=1 // pred_check
      _
    $region39: #{tpu_custom_call.1} parent=1 // pred_check_branch
      %83 = sbr.rel (0) target = $region41
    $region40: #{tpu_custom_call.1} parent=1 // pred_region
      %84 = dma.done [#allocation3], 64
    $region41: #{tpu_custom_call.1} parent=1 // pred_fallthru
      _
    // Predicated region
    $region42: #{tpu_custom_call.1} parent=1 // pred_check
      _
    $region43: #{tpu_custom_call.1} parent=1 // pred_check_branch
      %86 = sbr.rel (0) target = $region45
    $region44: #{tpu_custom_call.1} parent=1 // pred_region
      %87 = dma.done [#allocation6], 64
    $region45: #{tpu_custom_call.1} parent=1 // pred_fallthru
      _
    // Predicated region
    $region46: #{tpu_custom_call.1} parent=1 // pred_check
      _
    $region47: #{tpu_custom_call.1} parent=1 // pred_check_branch
      %89 = sbr.rel (0) target = $region49
    $region48: #{tpu_custom_call.1} parent=1 // pred_region
      %90 = dma.done [#allocation6], 1024
    $region49: #{tpu_custom_call.1} parent=1 // pred_fallthru
      _
    // Predicated region
    $region50: #{tpu_custom_call.1} parent=1 // pred_check
      _
    $region51: #{tpu_custom_call.1} parent=1 // pred_check_branch
      %92 = sbr.rel (0) target = $region53
    $region52: #{tpu_custom_call.1} parent=1 // pred_region
      %93 = dma.done [#allocation9], 1024
    $region53: #{tpu_custom_call.1} parent=1 // pred_fallthru
      _
    // Predicated region
    $region54: #{tpu_custom_call.1} parent=1 // pred_check
      _
    $region55: #{tpu_custom_call.1} parent=1 // pred_check_branch
      %95 = sbr.rel (0) target = $region57
    $region56: #{tpu_custom_call.1} parent=1 // pred_region
      %96 = dma.done [#allocation9], 1024
    $region57: #{tpu_custom_call.1} parent=1 // pred_fallthru
      _
    %v98 = vld [vmem:[#allocation2] sm:$0xf]
    %v99 = vld [vmem:[#allocation5] sm:$0xf]
    %v100 = vld [vmem:[%s2] sm:$0x1]
    %v102 = vlaneseq
    %v103 = vshrl.u32 %v102, 7
    %v104 = vsub.s32 0, %v103
    %v105 = vrot.slane %v100, %v104
    %vm107 = vcmask 64512
    %v109 = vsel %vm107, %v98, 0
    %vm111 = vcmask 1043456
    %v113 = vsel %vm111, %v99, 0
    %115 = vmatprep.subr.bf16.mxu0 0
    %116 = vmatpush1.bf16.msra.mxu0 0
    %117 = vmatprep.subr.bf16.mxu0 0
    %118 = vmatpush1.bf16.msra.mxu0 0
    %119 = vmatprep.subr.bf16.mxu0 0
    %120 = vmatpush1.bf16.msra.mxu0 0
    %121 = vmatprep.subr.bf16.mxu0 0
    %122 = vmatpush1.bf16.msra.mxu0 0
    %123 = vmatprep.subr.bf16.mxu0 0
    %124 = vmatpush1.bf16.msra.mxu0 0
    %125 = vmatprep.subr.bf16.mxu0 0
    %126 = vmatpush1.bf16.msra.mxu0 0
    %127 = vmatprep.subr.bf16.mxu0 0
    %128 = vmatpush1.bf16.msra.mxu0 0
    %129 = vmatprep.subr.bf16.mxu0 0
    %130 = vmatpush1.bf16.msra.mxu0 %v113
    %131 = vmatprep.subr.bf16.mxu0 0
    %132 = vmatpush2.bf16.msra.mxu0 0
    %133 = vmatprep.subr.bf16.mxu0 0
    %134 = vmatpush2.bf16.msra.mxu0 0
    %135 = vmatprep.subr.bf16.mxu0 0
    %136 = vmatpush2.bf16.msra.mxu0 0
    %137 = vmatprep.subr.bf16.mxu0 0
    %138 = vmatpush2.bf16.msra.mxu0 0
    %139 = vmatprep.subr.bf16.mxu0 0
    %140 = vmatpush2.bf16.msra.mxu0 0
    %141 = vmatprep.subr.bf16.mxu0 0
    %142 = vmatpush2.bf16.msra.mxu0 0
    %143 = vmatprep.subr.bf16.mxu0 0
    %144 = vmatpush2.bf16.msra.mxu0 0
    %145 = vmatprep.subr.bf16.mxu0 0
    %146 = vmatpush2.bf16.msra.mxu0 0
    %147 = vmatprep.mubr.bf16.mxu0 0
    %148 = vmatmul.mubr.bf16.gmra.mxu0 %v109
    %v149 = vpop.f32.mrf.mxu0
    %v150 = vadd.f32 %v105, %v149
    %v151 = vpop.f32.mrf.mxu0
    %v152 = vpop.f32.mrf.mxu0
    %v153 = vpop.f32.mrf.mxu0
    %154 = vdwg.mxu0
    %v155 = vmax.f32 %v150, 0.0
    %v156 = vpack.c.bf16 %v155, %v155
    %v157 = vld [vmem:[#allocation7] sm:$0xf]
    %v158 = vld [vmem:[#allocation7 + $0x4] sm:$0xf]
    %v159 = vld [vmem:[#allocation7 + $0x8] sm:$0xf]
    %v160 = vld [vmem:[#allocation7 + $0xc] sm:$0xf]
    %v161 = vld [vmem:[#allocation7 + $0x10] sm:$0xf]
    %v162 = vld [vmem:[#allocation7 + $0x14] sm:$0xf]
    %v163 = vld [vmem:[#allocation7 + $0x18] sm:$0xf]
    %v164 = vld [vmem:[#allocation7 + $0x1c] sm:$0xf]
    %v165 = vld [vmem:[#allocation7 + $0x20] sm:$0xf]
    %v166 = vld [vmem:[#allocation7 + $0x24] sm:$0xf]
    %v167 = vld [vmem:[#allocation7 + $0x28] sm:$0xf]
    %v168 = vld [vmem:[#allocation7 + $0x2c] sm:$0xf]
    %v169 = vld [vmem:[#allocation7 + $0x30] sm:$0xf]
    %v170 = vld [vmem:[#allocation7 + $0x34] sm:$0xf]
    %v171 = vld [vmem:[#allocation7 + $0x38] sm:$0xf]
    %v172 = vld [vmem:[#allocation7 + $0x3c] sm:$0xf]
    %v173 = vld [vmem:[%s4] sm:$0x1]
    %v175 = vlaneseq
    %v176 = vshrl.u32 %v175, 7
    %v177 = vsub.s32 0, %v176
    %v178 = vrot.slane %v173, %v177
    %v196 = vunpack.c.l.b16 %v157
    %v197 = vunpack.c.l.b16 %v158
    %v198 = vunpack.c.l.b16 %v159
    %v199 = vunpack.c.l.b16 %v160
    %v200 = vunpack.c.l.b16 %v161
    %v201 = vunpack.c.l.b16 %v162
    %v202 = vunpack.c.l.b16 %v163
    %v203 = vunpack.c.l.b16 %v164
    %v204 = vunpack.c.l.b16 %v165
    %v205 = vunpack.c.l.b16 %v166
    %v206 = vunpack.c.l.b16 %v167
    %v207 = vunpack.c.l.b16 %v168
    %v208 = vunpack.c.l.b16 %v169
    %v209 = vunpack.c.l.b16 %v170
    %v210 = vunpack.c.l.b16 %v171
    %v211 = vunpack.c.l.b16 %v172
    %v212 = vpack.c.b16 %v197, %v196
    %v213 = vpack.c.b16 %v199, %v198
    %v214 = vpack.c.b16 %v201, %v200
    %v215 = vpack.c.b16 %v203, %v202
    %v216 = vpack.c.b16 %v205, %v204
    %v217 = vpack.c.b16 %v207, %v206
    %v218 = vpack.c.b16 %v209, %v208
    %v219 = vpack.c.b16 %v211, %v210
    %228 = vmatprep.subr.bf16.mxu0 0
    %229 = vmatpush1.bf16.msra.mxu0 %v219
    %230 = vmatprep.subr.bf16.mxu0 0
    %231 = vmatpush1.bf16.msra.mxu0 %v218
    %232 = vmatprep.subr.bf16.mxu0 0
    %233 = vmatpush1.bf16.msra.mxu0 %v217
    %234 = vmatprep.subr.bf16.mxu0 0
    %235 = vmatpush1.bf16.msra.mxu0 %v216
    %236 = vmatprep.subr.bf16.mxu0 0
    %237 = vmatpush1.bf16.msra.mxu0 %v215
    %238 = vmatprep.subr.bf16.mxu0 0
    %239 = vmatpush1.bf16.msra.mxu0 %v214
    %240 = vmatprep.subr.bf16.mxu0 0
    %241 = vmatpush1.bf16.msra.mxu0 %v213
    %242 = vmatprep.subr.bf16.mxu0 0
    %243 = vmatpush1.bf16.msra.mxu0 %v212
    %244 = vmatprep.subr.bf16.mxu0 0
    %245 = vmatpush2.bf16.msra.mxu0 0
    %246 = vmatprep.subr.bf16.mxu0 0
    %247 = vmatpush2.bf16.msra.mxu0 0
    %248 = vmatprep.subr.bf16.mxu0 0
    %249 = vmatpush2.bf16.msra.mxu0 0
    %250 = vmatprep.subr.bf16.mxu0 0
    %251 = vmatpush2.bf16.msra.mxu0 0
    %252 = vmatprep.subr.bf16.mxu0 0
    %253 = vmatpush2.bf16.msra.mxu0 0
    %254 = vmatprep.subr.bf16.mxu0 0
    %255 = vmatpush2.bf16.msra.mxu0 0
    %256 = vmatprep.subr.bf16.mxu0 0
    %257 = vmatpush2.bf16.msra.mxu0 0
    %258 = vmatprep.subr.bf16.mxu0 0
    %259 = vmatpush2.bf16.msra.mxu0 0
    %260 = vmatprep.mubr.bf16.mxu0 0
    %261 = vmatmul.mubr.bf16.gmra.mxu0 %v156
    %v262 = vpop.f32.mrf.mxu0
    %v263 = vadd.f32 %v178, %v262
    %v264 = vpop.f32.mrf.mxu0
    %v265 = vpop.f32.mrf.mxu0
    %v266 = vpop.f32.mrf.mxu0
    %267 = vdwg.mxu0
    %v268 = vmax.f32 %v263, 0.0
    %v269 = vpack.c.bf16 %v268, %v268
    %v270 = vld [vmem:[#allocation8] sm:$0xf]
    %v271 = vld [vmem:[#allocation8 + $0x4] sm:$0xf]
    %v272 = vld [vmem:[#allocation8 + $0x8] sm:$0xf]
    %v273 = vld [vmem:[#allocation8 + $0xc] sm:$0xf]
    %v274 = vld [vmem:[#allocation8 + $0x10] sm:$0xf]
    %v275 = vld [vmem:[#allocation8 + $0x14] sm:$0xf]
    %v276 = vld [vmem:[#allocation8 + $0x18] sm:$0xf]
    %v277 = vld [vmem:[#allocation8 + $0x1c] sm:$0xf]
    %v278 = vld [vmem:[#allocation8 + $0x20] sm:$0xf]
    %v279 = vld [vmem:[#allocation8 + $0x24] sm:$0xf]
    %v280 = vld [vmem:[#allocation8 + $0x28] sm:$0xf]
    %v281 = vld [vmem:[#allocation8 + $0x2c] sm:$0xf]
    %v282 = vld [vmem:[#allocation8 + $0x30] sm:$0xf]
    %v283 = vld [vmem:[#allocation8 + $0x34] sm:$0xf]
    %v284 = vld [vmem:[#allocation8 + $0x38] sm:$0xf]
    %v285 = vld [vmem:[#allocation8 + $0x3c] sm:$0xf]
    %v286 = vld [vmem:[%s6] sm:$0x1]
    %v288 = vlaneseq
    %v289 = vshrl.u32 %v288, 7
    %v290 = vsub.s32 0, %v289
    %v291 = vrot.slane %v286, %v290
    %v309 = vunpack.c.l.b16 %v270
    %v310 = vunpack.c.l.b16 %v271
    %v311 = vunpack.c.l.b16 %v272
    %v312 = vunpack.c.l.b16 %v273
    %v313 = vunpack.c.l.b16 %v274
    %v314 = vunpack.c.l.b16 %v275
    %v315 = vunpack.c.l.b16 %v276
    %v316 = vunpack.c.l.b16 %v277
    %v317 = vunpack.c.l.b16 %v278
    %v318 = vunpack.c.l.b16 %v279
    %v319 = vunpack.c.l.b16 %v280
    %v320 = vunpack.c.l.b16 %v281
    %v321 = vunpack.c.l.b16 %v282
    %v322 = vunpack.c.l.b16 %v283
    %v323 = vunpack.c.l.b16 %v284
    %v324 = vunpack.c.l.b16 %v285
    %v325 = vpack.c.b16 %v310, %v309
    %v326 = vpack.c.b16 %v312, %v311
    %v327 = vpack.c.b16 %v314, %v313
    %v328 = vpack.c.b16 %v316, %v315
    %v329 = vpack.c.b16 %v318, %v317
    %v330 = vpack.c.b16 %v320, %v319
    %v331 = vpack.c.b16 %v322, %v321
    %v332 = vpack.c.b16 %v324, %v323
    %341 = vmatprep.subr.bf16.mxu0 0
    %342 = vmatpush1.bf16.msra.mxu0 %v332
    %343 = vmatprep.subr.bf16.mxu0 0
    %344 = vmatpush1.bf16.msra.mxu0 %v331
    %345 = vmatprep.subr.bf16.mxu0 0
    %346 = vmatpush1.bf16.msra.mxu0 %v330
    %347 = vmatprep.subr.bf16.mxu0 0
    %348 = vmatpush1.bf16.msra.mxu0 %v329
    %349 = vmatprep.subr.bf16.mxu0 0
    %350 = vmatpush1.bf16.msra.mxu0 %v328
    %351 = vmatprep.subr.bf16.mxu0 0
    %352 = vmatpush1.bf16.msra.mxu0 %v327
    %353 = vmatprep.subr.bf16.mxu0 0
    %354 = vmatpush1.bf16.msra.mxu0 %v326
    %355 = vmatprep.subr.bf16.mxu0 0
    %356 = vmatpush1.bf16.msra.mxu0 %v325
    %357 = vmatprep.subr.bf16.mxu0 0
    %358 = vmatpush2.bf16.msra.mxu0 0
    %359 = vmatprep.subr.bf16.mxu0 0
    %360 = vmatpush2.bf16.msra.mxu0 0
    %361 = vmatprep.subr.bf16.mxu0 0
    %362 = vmatpush2.bf16.msra.mxu0 0
    %363 = vmatprep.subr.bf16.mxu0 0
    %364 = vmatpush2.bf16.msra.mxu0 0
    %365 = vmatprep.subr.bf16.mxu0 0
    %366 = vmatpush2.bf16.msra.mxu0 0
    %367 = vmatprep.subr.bf16.mxu0 0
    %368 = vmatpush2.bf16.msra.mxu0 0
    %369 = vmatprep.subr.bf16.mxu0 0
    %370 = vmatpush2.bf16.msra.mxu0 0
    %371 = vmatprep.subr.bf16.mxu0 0
    %372 = vmatpush2.bf16.msra.mxu0 0
    %373 = vmatprep.mubr.bf16.mxu0 0
    %374 = vmatmul.mubr.bf16.gmra.mxu0 %v269
    %v375 = vpop.f32.mrf.mxu0
    %v376 = vadd.f32 %v291, %v375
    %v377 = vpop.f32.mrf.mxu0
    %v378 = vpop.f32.mrf.mxu0
    %v379 = vpop.f32.mrf.mxu0
    %380 = vdwg.mxu0
    %v381 = vmax.f32 %v376, 0.0
    %v382 = vpack.c.bf16 %v381, %v381
    %v383 = vld [vmem:[#allocation10] sm:$0xf]
    %v384 = vld [vmem:[#allocation10 + $0x4] sm:$0xf]
    %v385 = vld [vmem:[#allocation10 + $0x8] sm:$0xf]
    %v386 = vld [vmem:[#allocation10 + $0xc] sm:$0xf]
    %v387 = vld [vmem:[#allocation10 + $0x10] sm:$0xf]
    %v388 = vld [vmem:[#allocation10 + $0x14] sm:$0xf]
    %v389 = vld [vmem:[#allocation10 + $0x18] sm:$0xf]
    %v390 = vld [vmem:[#allocation10 + $0x1c] sm:$0xf]
    %v391 = vld [vmem:[#allocation10 + $0x20] sm:$0xf]
    %v392 = vld [vmem:[#allocation10 + $0x24] sm:$0xf]
    %v393 = vld [vmem:[#allocation10 + $0x28] sm:$0xf]
    %v394 = vld [vmem:[#allocation10 + $0x2c] sm:$0xf]
    %v395 = vld [vmem:[#allocation10 + $0x30] sm:$0xf]
    %v396 = vld [vmem:[#allocation10 + $0x34] sm:$0xf]
    %v397 = vld [vmem:[#allocation10 + $0x38] sm:$0xf]
    %v398 = vld [vmem:[#allocation10 + $0x3c] sm:$0xf]
    %v399 = vld [vmem:[%s8] sm:$0x1]
    %v401 = vlaneseq
    %v402 = vshrl.u32 %v401, 7
    %v403 = vsub.s32 0, %v402
    %v404 = vrot.slane %v399, %v403
    %v422 = vunpack.c.l.b16 %v383
    %v423 = vunpack.c.l.b16 %v384
    %v424 = vunpack.c.l.b16 %v385
    %v425 = vunpack.c.l.b16 %v386
    %v426 = vunpack.c.l.b16 %v387
    %v427 = vunpack.c.l.b16 %v388
    %v428 = vunpack.c.l.b16 %v389
    %v429 = vunpack.c.l.b16 %v390
    %v430 = vunpack.c.l.b16 %v391
    %v431 = vunpack.c.l.b16 %v392
    %v432 = vunpack.c.l.b16 %v393
    %v433 = vunpack.c.l.b16 %v394
    %v434 = vunpack.c.l.b16 %v395
    %v435 = vunpack.c.l.b16 %v396
    %v436 = vunpack.c.l.b16 %v397
    %v437 = vunpack.c.l.b16 %v398
    %v438 = vpack.c.b16 %v423, %v422
    %v439 = vpack.c.b16 %v425, %v424
    %v440 = vpack.c.b16 %v427, %v426
    %v441 = vpack.c.b16 %v429, %v428
    %v442 = vpack.c.b16 %v431, %v430
    %v443 = vpack.c.b16 %v433, %v432
    %v444 = vpack.c.b16 %v435, %v434
    %v445 = vpack.c.b16 %v437, %v436
    %454 = vmatprep.subr.bf16.mxu0 0
    %455 = vmatpush1.bf16.msra.mxu0 %v445
    %456 = vmatprep.subr.bf16.mxu0 0
    %457 = vmatpush1.bf16.msra.mxu0 %v444
    %458 = vmatprep.subr.bf16.mxu0 0
    %459 = vmatpush1.bf16.msra.mxu0 %v443
    %460 = vmatprep.subr.bf16.mxu0 0
    %461 = vmatpush1.bf16.msra.mxu0 %v442
    %462 = vmatprep.subr.bf16.mxu0 0
    %463 = vmatpush1.bf16.msra.mxu0 %v441
    %464 = vmatprep.subr.bf16.mxu0 0
    %465 = vmatpush1.bf16.msra.mxu0 %v440
    %466 = vmatprep.subr.bf16.mxu0 0
    %467 = vmatpush1.bf16.msra.mxu0 %v439
    %468 = vmatprep.subr.bf16.mxu0 0
    %469 = vmatpush1.bf16.msra.mxu0 %v438
    %470 = vmatprep.subr.bf16.mxu0 0
    %471 = vmatpush2.bf16.msra.mxu0 0
    %472 = vmatprep.subr.bf16.mxu0 0
    %473 = vmatpush2.bf16.msra.mxu0 0
    %474 = vmatprep.subr.bf16.mxu0 0
    %475 = vmatpush2.bf16.msra.mxu0 0
    %476 = vmatprep.subr.bf16.mxu0 0
    %477 = vmatpush2.bf16.msra.mxu0 0
    %478 = vmatprep.subr.bf16.mxu0 0
    %479 = vmatpush2.bf16.msra.mxu0 0
    %480 = vmatprep.subr.bf16.mxu0 0
    %481 = vmatpush2.bf16.msra.mxu0 0
    %482 = vmatprep.subr.bf16.mxu0 0
    %483 = vmatpush2.bf16.msra.mxu0 0
    %484 = vmatprep.subr.bf16.mxu0 0
    %485 = vmatpush2.bf16.msra.mxu0 0
    %486 = vmatprep.mubr.bf16.mxu0 0
    %487 = vmatmul.mubr.bf16.gmra.mxu0 %v382
    %v488 = vpop.f32.mrf.mxu0
    %v489 = vadd.f32 %v404, %v488
    %v490 = vpop.f32.mrf.mxu0
    %v491 = vpop.f32.mrf.mxu0
    %v492 = vpop.f32.mrf.mxu0
    %493 = vdwg.mxu0
    %494 = vst [vmem:[#allocation11] sm:$0xff] %v489
    // Predicated region
    $region58: #{tpu_custom_call.1} parent=1 // pred_check
      _
    $region59: #{tpu_custom_call.1} parent=1 // pred_check_branch
      %496 = sbr.rel (0) target = $region61
    $region60: #{tpu_custom_call.1} parent=1 // pred_region
      %s498 = ssub.s32 128, 128
      %499 = vsyncadd [#allocation4], %s498
      %s501 = sshll.u32 [#allocation11], 4
      %s502 = int_to_ptr.vmem [resolvable:$true] %s501
      %504 = dma.vmem_to_hbm [thread:$0]  %s502, 128, %s9, [#allocation4]
    $region61: #{tpu_custom_call.1} parent=1 // pred_fallthru
      _
    // Predicated region
    $region62: #{tpu_custom_call.1} parent=1 // pred_check
      _
    $region63: #{tpu_custom_call.1} parent=1 // pred_check_branch
      %506 = sbr.rel (0) target = $region65
    $region64: #{tpu_custom_call.1} parent=1 // pred_region
      %507 = dma.done [#allocation4], 128
    $region65: #{tpu_custom_call.1} parent=1 // pred_fallthru
      _
    %508 = vsyncpa [#allocation3], 1
    %509 = vsyncpa [#allocation6], 1
    %510 = vsyncpa [#allocation9], 1
    %511 = vsyncpa [#allocation4], 1

</llo_original>
